<compile_context>
chip_gen: v5e
topology: v5e:2x2
jax: 0.10.0
libtpu: 0.0.40
codegen_flags: <defaults>
</compile_context>

<pallas_src>
import jax
import jax.numpy as jnp
from jax.experimental import pallas as pl
from jax.experimental.pallas import tpu as pltpu


MIN_GRID_STEPS = 8  # >= ~4 steps per TensorCore under v7x megacore sharding


def ixg_kernel(x_ref, w1t_ref, w1_ref, b1_ref, w2_ref, o_ref):
    x = x_ref[...]          # [TB, Np]   (zero-padded past N)
    w1t = w1t_ref[...]      # [Np, H]    resident, zero-padded rows past N
    w1 = w1_ref[...]        # [H, Np]    resident, zero-padded cols past N
    b1 = b1_ref[...]        # [1, H]     resident
    w2 = w2_ref[...]        # [TM, H]    streamed over the M-tile axis
    tb = x.shape[0]
    tm, h_dim = w2.shape
    n_pad = w1.shape[1]

    # h[b, k] = sum_n x[b, n] * w1[k, n] -- uses the pre-transposed resident
    # copy so no per-grid-step transpose/relayout of w1 is ever needed.
    h = jnp.dot(x, w1t, preferred_element_type=jnp.float32) + b1     # [TB, H]
    s = 1.0 - jnp.tanh(h) ** 2                                        # [TB, H]

    # t[b, m, k] = s[b, k] * w2[m, k]; flatten leading dims (lane dim H is
    # untouched, sublane extent TM is a multiple of 8) so the second
    # contraction is one tall 2-D MXU matmul.
    t = (s[:, None, :] * w2[None, :, :]).reshape(tb * tm, h_dim)      # [TB*TM, H]
    grads = jnp.dot(t, w1, preferred_element_type=jnp.float32)        # [TB*TM, Np]
    grads = grads.reshape(tb, tm, n_pad)                              # [TB, TM, Np]

    # einsum('bmn,bn->bmn', grads, x); f32 accumulation, cast only at the store.
    o_ref[...] = (grads * x[:, None, :]).astype(o_ref.dtype)


def _vmem_plan():
    """(tile working-set budget, vmem_limit_bytes) from per-core VMEM capacity."""
    try:
        cap = int(pltpu.get_tpu_info().vmem_capacity_bytes)
    except Exception:
        cap = 64 * 1024 * 1024  # conservative fallback (v7x per-TC size)
    budget = cap // 2           # v5e/v6e: 64 MiB; v7x: 32 MiB per core
    limit = cap * 3 // 4        # v5e/v6e: 96 MiB; v7x: 48 MiB per core
    return budget, limit


def _divisor_tiles(dim):
    """Candidate tile sizes: multiples of 8 dividing `dim`, descending."""
    if dim % 8 != 0:
        return [dim]  # single full block (block dims equal to array dims)
    return [t for t in range(dim, 7, -8) if dim % t == 0]


def _pick_tiles(batch, m, n_pad, h, out_itemsize, budget):
    """Largest (tb, tm) whose f32 working set fits `budget`, then clamp tb so
    the grid keeps enough steps for pipelining / megacore overlap."""
    tbs, tms = _divisor_tiles(batch), _divisor_tiles(m)
    # Resident (constant index map) inputs: w1, w1_t, b1 (worst case x2 buffers).
    resident = 2 * 4 * (2 * h * n_pad + h)
    avail = max(budget - resident, 4096)

    def fits(tb, tm):
        work = 4 * (2 * tb * n_pad        # x block (double-buffered, f32)
                    + 2 * tm * h          # w2 block (double-buffered, f32)
                    + tb * tm * h         # t = s (*) w2 intermediate (f32)
                    + tb * tm * n_pad     # grads intermediate (f32)
                    + 2 * tb * h)         # h, s temporaries (f32)
        work += out_itemsize * 2 * tb * tm * n_pad   # output block (double-buffered)
        return work <= avail

    tb, tm = tbs[-1], tms[-1]
    found = False
    for cand_tb in tbs:            # prefer the largest batch tile,
        for cand_tm in tms:        # shrinking the M tile first when over budget
            if fits(cand_tb, cand_tm):
                tb, tm = cand_tb, cand_tm
                found = True
                break
        if found:
            break

    # Keep >= MIN_GRID_STEPS grid steps (v7x megacore overlap); shrink the batch
    # tile (never below 8 rows) rather than letting the grid collapse to 1-2 steps.
    smaller = [t for t in tbs if t < tb]
    while smaller and (batch // tb) * (m // tm) < MIN_GRID_STEPS:
        tb = smaller[0]
        smaller = [t for t in tbs if t < tb]
    return tb, tm


def input_x_gradient(x, w1, b1, w2, *, out_dtype=jnp.float32, tb=None, tm=None,
                     lane_pad=True):
    """out[b, m, n] = (W2 diag(1 - tanh(W1 x_b + b1)^2) W1)[m, n] * x[b, n].

    out_dtype=jnp.bfloat16 halves the dominant HBM writeback (accumulation stays
    f32 in-kernel); keep the f32 default only when exact parity with the f32
    PyTorch reference is required.
    """
    B, N = x.shape
    H = w1.shape[0]
    M = w2.shape[0]

    # Lane-dense output: pad the lane dim to a multiple of 128 so every store is
    # an unmasked vst with >= 512 B DMA rows.  No-op when N % 128 == 0.
    n_pad = ((N + 127) // 128) * 128 if lane_pad else N
    if n_pad != N:
        pad = n_pad - N
        x_p = jnp.pad(x, ((0, 0), (0, pad)))
        w1_p = jnp.pad(w1, ((0, 0), (0, pad)))
    else:
        x_p, w1_p = x, w1
    w1t_p = w1_p.T                 # one-time wrapper-side transpose, stays resident
    b1_2d = b1.reshape(1, H)

    budget, vmem_limit = _vmem_plan()
    itemsize = jnp.dtype(out_dtype).itemsize
    auto_tb, auto_tm = _pick_tiles(B, M, n_pad, H, itemsize, budget)
    tb = auto_tb if tb is None else tb
    tm = auto_tm if tm is None else tm

    grid = (pl.cdiv(B, tb), pl.cdiv(M, tm))

    out_padded = pl.pallas_call(
        ixg_kernel,
        out_shape=jax.ShapeDtypeStruct((B, M, n_pad), out_dtype),
        grid=grid,
        in_specs=[
            pl.BlockSpec((tb, n_pad), lambda i, j: (i, 0)),   # x: streamed per batch tile
            pl.BlockSpec((n_pad, H), lambda i, j: (0, 0)),    # w1_t: VMEM-resident
            pl.BlockSpec((H, n_pad), lambda i, j: (0, 0)),    # w1:  VMEM-resident
            pl.BlockSpec((1, H), lambda i, j: (0, 0)),        # b1:  VMEM-resident
            pl.BlockSpec((tm, H), lambda i, j: (j, 0)),       # w2: streamed per M tile
        ],
        out_specs=pl.BlockSpec((tb, tm, n_pad), lambda i, j: (i, j, 0)),
        compiler_params=pltpu.CompilerParams(
            dimension_semantics=("parallel", "parallel"),
            vmem_limit_bytes=vmem_limit),
    )(x_p, w1t_p, w1_p, b1_2d, w2)

    if n_pad != N:
        out_padded = out_padded[:, :, :N]
    return out_padded


if __name__ == "__main__":
    # Small shapes; B=16 gives a multi-step pipelined batch grid.
    B, N, H, M = 16, 32, 32, 16

    key = jax.random.PRNGKey(0)
    kx, k1, kb1, k2, kb2 = jax.random.split(key, 5)
    x = jax.random.normal(kx, (B, N), dtype=jnp.float32)
    w1 = jax.random.normal(k1, (H, N), dtype=jnp.float32) * 0.1
    b1 = jax.random.normal(kb1, (H,), dtype=jnp.float32) * 0.1
    w2 = jax.random.normal(k2, (M, H), dtype=jnp.float32) * 0.1
    b2 = jax.random.normal(kb2, (M,), dtype=jnp.float32) * 0.1  # no effect on Jacobian

    # f32 output: exact parity with the PyTorch reference semantics.
    out = jax.block_until_ready(input_x_gradient(x, w1, b1, w2, out_dtype=jnp.float32))

    # Reference: exactly the PyTorch semantics (vmap(jacrev(f)) then einsum).
    def f(xi):
        return jnp.tanh(xi @ w1.T + b1) @ w2.T + b2

    jac = jax.vmap(jax.jacrev(f))(x)                       # [B, M, N]
    expected = jnp.einsum('bmn,bn->bmn', jac, x)           # [B, M, N]

    assert out.shape == (B, M, N)
    assert jnp.allclose(out, expected, atol=1e-5, rtol=1e-5), (
        float(jnp.max(jnp.abs(out - expected))))

    # bf16 output path (recommended in production: halves the dominant HBM
    # writeback; accumulation stays f32 in-kernel, cast only at the store).
    out_bf16 = jax.block_until_ready(
        input_x_gradient(x, w1, b1, w2, out_dtype=jnp.bfloat16))
    assert out_bf16.shape == (B, M, N)
    assert jnp.allclose(out_bf16.astype(jnp.float32), expected,
                        atol=2e-2, rtol=2e-2)

    print("KERNEL_OK")
</pallas_src>

<mosaic_0001>
module attributes {stable_mosaic.version = 11 : i64} {
  func.func @ixg_kernel(%arg0: i32, %arg1: i32, %arg2: memref<8x128xf32, #tpu.memory_space<vmem>>, %arg3: memref<128x32xf32, #tpu.memory_space<vmem>>, %arg4: memref<32x128xf32, #tpu.memory_space<vmem>>, %arg5: memref<1x32xf32, #tpu.memory_space<vmem>>, %arg6: memref<16x32xf32, #tpu.memory_space<vmem>>, %arg7: memref<8x16x128xf32, #tpu.memory_space<vmem>>) attributes {dimension_semantics = [#tpu.dimension_semantics<parallel>, #tpu.dimension_semantics<parallel>], iteration_bounds = array<i64: 2, 1>, scalar_prefetch = 0 : i64, scratch_operands = 0 : i64, tpu.core_type = #tpu.core_type<tc>, window_params = [{transform_indices = @transform_0, window_bounds = array<i64: 8, 128>}, {pipeline_mode = #tpu.pipeline_mode<synchronous>, transform_indices = @transform_1, window_bounds = array<i64: 128, 32>}, {pipeline_mode = #tpu.pipeline_mode<synchronous>, transform_indices = @transform_2, window_bounds = array<i64: 32, 128>}, {pipeline_mode = #tpu.pipeline_mode<synchronous>, transform_indices = @transform_3, window_bounds = array<i64: 1, 32>}, {transform_indices = @transform_4, window_bounds = array<i64: 16, 32>}, {transform_indices = @transform_5, window_bounds = array<i64: 8, 16, 128>}]} {
    %c0 = arith.constant 0 : index
    %c0_0 = arith.constant 0 : index
    %0 = vector.load %arg2[%c0, %c0_0] : memref<8x128xf32, #tpu.memory_space<vmem>>, vector<8x128xf32>
    %c0_1 = arith.constant 0 : index
    %c0_2 = arith.constant 0 : index
    %1 = vector.load %arg3[%c0_1, %c0_2] : memref<128x32xf32, #tpu.memory_space<vmem>>, vector<128x32xf32>
    %c0_3 = arith.constant 0 : index
    %c0_4 = arith.constant 0 : index
    %2 = vector.load %arg4[%c0_3, %c0_4] : memref<32x128xf32, #tpu.memory_space<vmem>>, vector<32x128xf32>
    %c0_5 = arith.constant 0 : index
    %c0_6 = arith.constant 0 : index
    %3 = vector.load %arg5[%c0_5, %c0_6] : memref<1x32xf32, #tpu.memory_space<vmem>>, vector<1x32xf32>
    %c0_7 = arith.constant 0 : index
    %c0_8 = arith.constant 0 : index
    %4 = vector.load %arg6[%c0_7, %c0_8] : memref<16x32xf32, #tpu.memory_space<vmem>>, vector<16x32xf32>
    %cst = arith.constant dense<0.000000e+00> : vector<8x32xf32>
    %5 = tpu.matmul %0, %1, %cst {dimension_numbers = #tpu.dot_dimension_numbers<[1], [0], [0], [1], [0, 0, 1, 1], [], []>} : vector<8x128xf32>, vector<128x32xf32>, vector<8x32xf32> -> vector<8x32xf32>
    %6 = vector.broadcast %3 : vector<1x32xf32> to vector<8x32xf32>
    %7 = arith.addf %5, %6 : vector<8x32xf32>
    %8 = math.tanh %7 : vector<8x32xf32>
    %9 = arith.mulf %8, %8 : vector<8x32xf32>
    %cst_9 = arith.constant 1.000000e+00 : f32
    %10 = vector.broadcast %cst_9 : f32 to vector<8x32xf32>
    %11 = arith.subf %10, %9 : vector<8x32xf32>
    %12 = vector.shape_cast %11 : vector<8x32xf32> to vector<8x1x32xf32>
    %13 = vector.shape_cast %4 : vector<16x32xf32> to vector<1x16x32xf32>
    %14 = vector.broadcast %12 : vector<8x1x32xf32> to vector<8x16x32xf32>
    %15 = vector.broadcast %13 : vector<1x16x32xf32> to vector<8x16x32xf32>
    %16 = arith.mulf %14, %15 : vector<8x16x32xf32>
    %17 = vector.shape_cast %16 : vector<8x16x32xf32> to vector<128x32xf32>
    %cst_10 = arith.constant dense<0.000000e+00> : vector<128x128xf32>
    %18 = tpu.matmul %17, %2, %cst_10 {dimension_numbers = #tpu.dot_dimension_numbers<[1], [0], [0], [1], [0, 0, 1, 1], [], []>} : vector<128x32xf32>, vector<32x128xf32>, vector<128x128xf32> -> vector<128x128xf32>
    %19 = vector.shape_cast %18 : vector<128x128xf32> to vector<8x16x128xf32>
    %20 = vector.shape_cast %0 : vector<8x128xf32> to vector<8x1x128xf32>
    %21 = vector.broadcast %20 : vector<8x1x128xf32> to vector<8x16x128xf32>
    %22 = arith.mulf %19, %21 : vector<8x16x128xf32>
    %c0_11 = arith.constant 0 : index
    %c0_12 = arith.constant 0 : index
    %c0_13 = arith.constant 0 : index
    %23 = vector.load %arg7[%c0_11, %c0_12, %c0_13] : memref<8x16x128xf32, #tpu.memory_space<vmem>>, vector<8x16x128xf32>
    tpu.vector_store %arg7[%c0_11, %c0_12, %c0_13], %22 {strides = array<i32>} : memref<8x16x128xf32, #tpu.memory_space<vmem>>, vector<8x16x128xf32>,
    return
  }
  func.func @transform_0(%arg0: i32, %arg1: i32) -> (i32, i32) {
    %c0_i32 = arith.constant 0 : i32
    %c0_i32_0 = arith.constant 0 : i32
    return %arg0, %c0_i32 : i32, i32
  }
  func.func @transform_1(%arg0: i32, %arg1: i32) -> (i32, i32) {
    %c0_i32 = arith.constant 0 : i32
    %c0_i32_0 = arith.constant 0 : i32
    %c0_i32_1 = arith.constant 0 : i32
    return %c0_i32, %c0_i32_0 : i32, i32
  }
  func.func @transform_2(%arg0: i32, %arg1: i32) -> (i32, i32) {
    %c0_i32 = arith.constant 0 : i32
    %c0_i32_0 = arith.constant 0 : i32
    %c0_i32_1 = arith.constant 0 : i32
    return %c0_i32, %c0_i32_0 : i32, i32
  }
  func.func @transform_3(%arg0: i32, %arg1: i32) -> (i32, i32) {
    %c0_i32 = arith.constant 0 : i32
    %c0_i32_0 = arith.constant 0 : i32
    %c0_i32_1 = arith.constant 0 : i32
    return %c0_i32, %c0_i32_0 : i32, i32
  }
  func.func @transform_4(%arg0: i32, %arg1: i32) -> (i32, i32) {
    %c0_i32 = arith.constant 0 : i32
    %c0_i32_0 = arith.constant 0 : i32
    return %arg1, %c0_i32 : i32, i32
  }
  func.func @transform_5(%arg0: i32, %arg1: i32) -> (i32, i32, i32) {
    %c0_i32 = arith.constant 0 : i32
    %c0_i32_0 = arith.constant 0 : i32
    return %arg0, %arg1, %c0_i32 : i32, i32, i32
  }
}

</mosaic_0001>

<llo_original>
// kernel: tpu_custom_call.1
$region0: #{tpu_custom_call.1}
  #allocation0 [shape = 'u32[]', space=smem, size = 0x4, offset = 0x4, fixed_abs, tag = 'smem constant byte address 0x4 - core index']
  #allocation1 [shape = 'u32[72,128]{1,0:T(1,128)}', space=vmem, size = 0x9000, scoped, tag = 'internal scratch']
  %s0 = inlined_call_operand.vmem [shape: f32[16,128], index: 0, kind: input, shape index: {}]
  %s1 = inlined_call_operand.vmem [shape: f32[128,32], index: 1, kind: input, shape index: {}]
  %s2 = inlined_call_operand.vmem [shape: f32[32,128], index: 2, kind: input, shape index: {}]
  %s3 = inlined_call_operand.vmem [shape: f32[1,32], index: 3, kind: input, shape index: {}]
  %s4 = inlined_call_operand.vmem [shape: f32[16,32], index: 4, kind: input, shape index: {}]
  %s5 = inlined_call_operand.hbm [shape: f32[16,16,128], index: 5, kind: output, shape index: {}]
  %s6 = sld [smem:[#allocation0]]
  $region53: #{tpu_custom_call.1} parent=0
    _
  %s8 = ssub.s32 1, %s6
  %s9 = scalar_select 0, %s8, %s6
  $region1: #{tpu_custom_call.1} parent=0
    #allocation2 [shape = 'u8[131072]{0}', space=vmem, size = 0x20000, scoped, tag = 'output window, operand 0']
    #allocation3 [shape = 's32[2]{0}', space=sflag, size = 0x8, scoped, tag = 'scoped memory for tpu_custom_call.1']
    %10 = vsyncpa [#allocation3], 0
    %s11 = scalar_lea.sflag [#allocation3], 1
    %12 = vsyncpa %s11, 0
    loop: start=0, step=1, limit=4
    $region2: #{tpu_custom_call.1} parent=1 // loop_pre_header
      _
    $region3: #{tpu_custom_call.1} parent=1 // loop_header
      %s14 = sphi 0, %s18
      %p15 = scmp.ge.s32.totalorder %s14, 4
      %s21 = sphi 0, %s33
      %s22 = sphi 0, %s29
      %s23 = sphi 0, %s21
      %s24 = sphi 0, %s22
      %s25 = sphi 0, %s23
      %s26 = sphi 0, %s24
      %s36 = sphi 0, %s38
      %s39 = sphi 0, %s36
      %s40 = sphi 0, %s39
      %s56 = sphi 0, %s40
      %s60 = sphi 0, %s60
      %s62 = sphi 0, %s60
      %s63 = sphi 0, %s62
      %s77 = sphi 0, %s63
      %s81 = sphi 0, %s81
      %s83 = sphi 0, %s81
      %s84 = sphi 0, %s83
      %s98 = sphi 0, %s84
      %s102 = sphi 0, %s102
      %s104 = sphi 0, %s102
      %s105 = sphi 0, %s104
      %s119 = sphi 0, %s105
      %s125 = sphi 0, %s127
      %s128 = sphi 0, %s125
      %s129 = sphi 0, %s128
      %s145 = sphi 0, %s129
      %s153 = sphi 0, %s155
      %s156 = sphi 0, %s153
      %s157 = sphi 0, %s156
      %s173 = sphi 0, %s157
    $region4: #{tpu_custom_call.1} parent=1 // loop_header_branch
      %17 = sbr.rel (%p15) target = $region8
    $region5: #{tpu_custom_call.1} parent=1 // loop_body
      %s19 = ssub.s32 %s14, 1
      %s20 = ssub.s32 %s14, 2
      %s27 = sadd.s32 1, %s22
      %p28 = scmp.ge.s32.totalorder %s27, 1
      %s29 = scalar_select %p28, 0, %s27
      %s30 = sadd.s32 1, %s21
      %s31 = scalar_select %p28, %s30, %s21
      %p32 = scmp.ge.s32.totalorder %s31, 2
      %s33 = scalar_select %p32, 0, %s31
      %s34 = ssub.s32 %s21, %s33
      %p35 = scmp.eq.s32.totalorder %s34, 0
      %s37 = sadd.s32 %s36, 1
      %s38 = scalar_select %p35, %s36, %s37
      %p41 = pneg %p35
      %p42 = scmp.eq.s32.totalorder %s14, 1
      %p43 = por %p41, %p42
      %p44 = scmp.ne.s32.totalorder %s36, %s39
      %p45 = scmp.eq.s32.totalorder %s14, 0
      %p46 = por %p44, %p45
      %p47 = scmp.ne.s32.totalorder %s36, %s39
      %p48 = scmp.eq.s32.totalorder %s19, 1
      %p49 = por %p47, %p48
      %p50 = scmp.ne.s32.totalorder %s39, %s40
      %p51 = scmp.eq.s32.totalorder %s19, 0
      %p52 = por %p50, %p51
      %p53 = scmp.ne.s32.totalorder %s39, %s40
      %p54 = scmp.eq.s32.totalorder %s20, 1
      %p55 = por %p53, %p54
      %p57 = scmp.ne.s32.totalorder %s40, %s56
      %p58 = scmp.eq.s32.totalorder %s20, 0
      %p59 = por %p57, %p58
      %s61 = sadd.s32 %s60, 1
      %p64 = scmp.eq.s32.totalorder %s14, 1
      %p65 = scmp.ne.s32.totalorder %s60, %s62
      %p66 = scmp.eq.s32.totalorder %s14, 0
      %p67 = por %p65, %p66
      %p68 = scmp.ne.s32.totalorder %s60, %s62
      %p69 = scmp.eq.s32.totalorder %s19, 1
      %p70 = por %p68, %p69
      %p71 = scmp.ne.s32.totalorder %s62, %s63
      %p72 = scmp.eq.s32.totalorder %s19, 0
      %p73 = por %p71, %p72
      %p74 = scmp.ne.s32.totalorder %s62, %s63
      %p75 = scmp.eq.s32.totalorder %s20, 1
      %p76 = por %p74, %p75
      %p78 = scmp.ne.s32.totalorder %s63, %s77
      %p79 = scmp.eq.s32.totalorder %s20, 0
      %p80 = por %p78, %p79
      %s82 = sadd.s32 %s81, 1
      %p85 = scmp.eq.s32.totalorder %s14, 1
      %p86 = scmp.ne.s32.totalorder %s81, %s83
      %p87 = scmp.eq.s32.totalorder %s14, 0
      %p88 = por %p86, %p87
      %p89 = scmp.ne.s32.totalorder %s81, %s83
      %p90 = scmp.eq.s32.totalorder %s19, 1
      %p91 = por %p89, %p90
      %p92 = scmp.ne.s32.totalorder %s83, %s84
      %p93 = scmp.eq.s32.totalorder %s19, 0
      %p94 = por %p92, %p93
      %p95 = scmp.ne.s32.totalorder %s83, %s84
      %p96 = scmp.eq.s32.totalorder %s20, 1
      %p97 = por %p95, %p96
      %p99 = scmp.ne.s32.totalorder %s84, %s98
      %p100 = scmp.eq.s32.totalorder %s20, 0
      %p101 = por %p99, %p100
      %s103 = sadd.s32 %s102, 1
      %p106 = scmp.eq.s32.totalorder %s14, 1
      %p107 = scmp.ne.s32.totalorder %s102, %s104
      %p108 = scmp.eq.s32.totalorder %s14, 0
      %p109 = por %p107, %p108
      %p110 = scmp.ne.s32.totalorder %s102, %s104
      %p111 = scmp.eq.s32.totalorder %s19, 1
      %p112 = por %p110, %p111
      %p113 = scmp.ne.s32.totalorder %s104, %s105
      %p114 = scmp.eq.s32.totalorder %s19, 0
      %p115 = por %p113, %p114
      %p116 = scmp.ne.s32.totalorder %s104, %s105
      %p117 = scmp.eq.s32.totalorder %s20, 1
      %p118 = por %p116, %p117
      %p120 = scmp.ne.s32.totalorder %s105, %s119
      %p121 = scmp.eq.s32.totalorder %s20, 0
      %p122 = por %p120, %p121
      %s123 = ssub.s32 %s22, %s29
      %p124 = scmp.eq.s32.totalorder %s123, 0
      %s126 = sadd.s32 %s125, 1
      %s127 = scalar_select %p124, %s125, %s126
      %p130 = pneg %p124
      %p131 = scmp.eq.s32.totalorder %s14, 1
      %p132 = por %p130, %p131
      %p133 = scmp.ne.s32.totalorder %s125, %s128
      %p134 = scmp.eq.s32.totalorder %s14, 0
      %p135 = por %p133, %p134
      %p136 = scmp.ne.s32.totalorder %s125, %s128
      %p137 = scmp.eq.s32.totalorder %s19, 1
      %p138 = por %p136, %p137
      %p139 = scmp.ne.s32.totalorder %s128, %s129
      %p140 = scmp.eq.s32.totalorder %s19, 0
      %p141 = por %p139, %p140
      %p142 = scmp.ne.s32.totalorder %s128, %s129
      %p143 = scmp.eq.s32.totalorder %s20, 1
      %p144 = por %p142, %p143
      %p146 = scmp.ne.s32.totalorder %s129, %s145
      %p147 = scmp.eq.s32.totalorder %s20, 0
      %p148 = por %p146, %p147
      %s149 = ssub.s32 %s21, %s33
      %s150 = ssub.s32 %s22, %s29
      %s151 = sor.u32 %s149, %s150
      %p152 = scmp.eq.s32.totalorder %s151, 0
      %s154 = sadd.s32 %s153, 1
      %s155 = scalar_select %p152, %s153, %s154
      %p158 = pneg %p152
      %p159 = scmp.eq.s32.totalorder %s14, 1
      %p160 = por %p158, %p159
      %p161 = scmp.ne.s32.totalorder %s153, %s156
      %p162 = scmp.eq.s32.totalorder %s14, 0
      %p163 = por %p161, %p162
      %p164 = scmp.ne.s32.totalorder %s153, %s156
      %p165 = scmp.eq.s32.totalorder %s19, 1
      %p166 = por %p164, %p165
      %p167 = scmp.ne.s32.totalorder %s156, %s157
      %p168 = scmp.eq.s32.totalorder %s19, 0
      %p169 = por %p167, %p168
      %p170 = scmp.ne.s32.totalorder %s156, %s157
      %p171 = scmp.eq.s32.totalorder %s20, 1
      %p172 = por %p170, %p171
      %p174 = scmp.ne.s32.totalorder %s157, %s173
      %p175 = scmp.eq.s32.totalorder %s20, 0
      %p176 = por %p174, %p175
      %p177 = scmp.le.s32.totalorder 1, %s14
      %p178 = scmp.lt.s32.totalorder %s14, 3
      %p179 = pnand %p177, %p178
      %p180 = pneg %p179
      // Predicated region
      $region9: #{tpu_custom_call.1} parent=5 // pred_check
        _
      $region10: #{tpu_custom_call.1} parent=5 // pred_check_branch
        %182 = sbr.rel (%p179) target = $region12
      $region11: #{tpu_custom_call.1} parent=5 // pred_region
        %s183 = ssub.s32 %s14, 1
        // Predicated region
        $region13: #{tpu_custom_call.1} parent=11 // pred_check
          %p184 = pneg %p73
        $region14: #{tpu_custom_call.1} parent=11 // pred_check_branch
          %186 = sbr.rel (%p184) target = $region16
        $region15: #{tpu_custom_call.1} parent=11 // pred_region
          _
        $region16: #{tpu_custom_call.1} parent=11 // pred_fallthru
          _
        // Predicated region
        $region17: #{tpu_custom_call.1} parent=11 // pred_check
          %p187 = pneg %p94
        $region18: #{tpu_custom_call.1} parent=11 // pred_check_branch
          %189 = sbr.rel (%p187) target = $region20
        $region19: #{tpu_custom_call.1} parent=11 // pred_region
          _
        $region20: #{tpu_custom_call.1} parent=11 // pred_fallthru
          _
        // Predicated region
        $region21: #{tpu_custom_call.1} parent=11 // pred_check
          %p190 = pneg %p115
        $region22: #{tpu_custom_call.1} parent=11 // pred_check_branch
          %192 = sbr.rel (%p190) target = $region24
        $region23: #{tpu_custom_call.1} parent=11 // pred_region
          _
        $region24: #{tpu_custom_call.1} parent=11 // pred_fallthru
          _
        // Predicated region
        $region25: #{tpu_custom_call.1} parent=11 // pred_check
          %p193 = pneg %p141
        $region26: #{tpu_custom_call.1} parent=11 // pred_check_branch
          %195 = sbr.rel (%p193) target = $region28
        $region27: #{tpu_custom_call.1} parent=11 // pred_region
          %s196 = smul.u32 2, %s24
          %p197 = scmp.lt.s32.totalorder %s196, 1
          %s198 = scalar_select %p197, %s196, 1
          %s199 = smul.addr %s198, 8
          %s200 = scalar_lea.vmem %s4, %s199
          %s201 = smul.u32 2, %s24
        $region28: #{tpu_custom_call.1} parent=11 // pred_fallthru
          _
      $region12: #{tpu_custom_call.1} parent=5 // pred_fallthru
        _
      %p202 = scmp.lt.s32.totalorder %s14, 2
      // Predicated region
      $region29: #{tpu_custom_call.1} parent=5 // pred_check
        %p203 = pneg %p202
      $region30: #{tpu_custom_call.1} parent=5 // pred_check_branch
        %205 = sbr.rel (%p203) target = $region32
      $region31: #{tpu_custom_call.1} parent=5 // pred_region
        // Predicated region
        $region33: #{tpu_custom_call.1} parent=31 // pred_check
          %p206 = pneg %p46
        $region34: #{tpu_custom_call.1} parent=31 // pred_check_branch
          %208 = sbr.rel (%p206) target = $region36
        $region35: #{tpu_custom_call.1} parent=31 // pred_region
          %p209 = scmp.lt.s32.totalorder %s21, 1
          %s210 = scalar_select %p209, %s21, 1
          %s211 = smul.addr %s210, 8
          %s212 = scalar_lea.vmem %s0, %s211
        $region36: #{tpu_custom_call.1} parent=31 // pred_fallthru
          _
      $region32: #{tpu_custom_call.1} parent=5 // pred_fallthru
        _
      %p213 = scmp.le.s32.totalorder 1, %s14
      %p214 = scmp.lt.s32.totalorder %s14, 3
      %p215 = pnand %p213, %p214
      %p216 = pneg %p215
      // Predicated region
      $region37: #{tpu_custom_call.1} parent=5 // pred_check
        _
      $region38: #{tpu_custom_call.1} parent=5 // pred_check_branch
        %218 = sbr.rel (%p215) target = $region40
      $region39: #{tpu_custom_call.1} parent=5 // pred_region
        %s219 = ssub.s32 %s14, 1
        %p220 = scmp.lt.s32.totalorder %s23, 1
        %s221 = scalar_select %p220, %s23, 1
        %s222 = smul.addr %s221, 8
        %s223 = scalar_lea.vmem %s0, %s222
        %p224 = pneg %p52
        %p225 = pneg %p49
        %p226 = pneg %p73
        %p227 = pneg %p70
        %p228 = pneg %p94
        %p229 = pneg %p91
        %p230 = pneg %p115
        %p231 = pneg %p112
        %s232 = smul.u32 2, %s24
        %p233 = scmp.lt.s32.totalorder %s232, 1
        %s234 = scalar_select %p233, %s232, 1
        %s235 = smul.addr %s234, 8
        %s236 = scalar_lea.vmem %s4, %s235
        %p237 = pneg %p141
        %p238 = pneg %p138
        %p239 = pneg %p169
        %p240 = pneg %p166
        %s241 = sand.u32 %s156, 1
        %s242 = scalar_lea.sflag [#allocation3], %s241
        %s243 = sand.u32 %s156, 1
        %s244 = smul.addr %s243, 128
        %s245 = scalar_lea.vmem [#allocation2], %s244
        %p246 = scmp.lt.s32.totalorder %s23, 1
        %s247 = scalar_select %p246, %s23, 1
        %s248 = smul.addr %s247, 8
        %s249 = scalar_lea.vmem %s0, %s248
        %s250 = smul.u32 2, %s24
        %p251 = scmp.lt.s32.totalorder %s250, 1
        %s252 = scalar_select %p251, %s250, 1
        %s253 = smul.addr %s252, 8
        %s254 = scalar_lea.vmem %s4, %s253
        %s255 = smul.u32 2, %s24
        %s256 = smul.u32 8, %s23
        %s257 = smul.u32 2, %s24
        %v258 = vld [vmem:[%s249] sm:$0xff]
        %v259 = vld [vmem:[%s1] sm:$0xff]
        %v260 = vld [vmem:[%s1 + $0x8] sm:$0xff]
        %v261 = vld [vmem:[%s1 + $0x10] sm:$0xff]
        %v262 = vld [vmem:[%s1 + $0x18] sm:$0xff]
        %v263 = vld [vmem:[%s1 + $0x20] sm:$0xff]
        %v264 = vld [vmem:[%s1 + $0x28] sm:$0xff]
        %v265 = vld [vmem:[%s1 + $0x30] sm:$0xff]
        %v266 = vld [vmem:[%s1 + $0x38] sm:$0xff]
        %v267 = vld [vmem:[%s1 + $0x40] sm:$0xff]
        %v268 = vld [vmem:[%s1 + $0x48] sm:$0xff]
        %v269 = vld [vmem:[%s1 + $0x50] sm:$0xff]
        %v270 = vld [vmem:[%s1 + $0x58] sm:$0xff]
        %v271 = vld [vmem:[%s1 + $0x60] sm:$0xff]
        %v272 = vld [vmem:[%s1 + $0x68] sm:$0xff]
        %v273 = vld [vmem:[%s1 + $0x70] sm:$0xff]
        %v274 = vld [vmem:[%s1 + $0x78] sm:$0xff]
        %v275 = vld [vmem:[%s2] sm:$0xff]
        %v276 = vld [vmem:[%s2 + $0x8] sm:$0xff]
        %v277 = vld [vmem:[%s2 + $0x10] sm:$0xff]
        %v278 = vld [vmem:[%s2 + $0x18] sm:$0xff]
        %v279 = vld [vmem:[%s3] sm:$0x1]
        %v280 = vld [vmem:[%s254] sm:$0xff]
        %v281 = vld [vmem:[%s254 + $0x8] sm:$0xff]
        %v283 = vperm.slane %v279, 0
        %285 = vmatpush.msra.mxu0 %v274
        %286 = vmatpush.msra.mxu0 %v273
        %287 = vmatpush.msra.mxu0 %v272
        %288 = vmatpush.msra.mxu0 %v271
        %289 = vmatpush.msra.mxu0 %v270
        %290 = vmatpush.msra.mxu0 %v269
        %291 = vmatpush.msra.mxu0 %v268
        %292 = vmatpush.msra.mxu0 %v267
        %293 = vmatpush.msra.mxu0 %v266
        %294 = vmatpush.msra.mxu0 %v265
        %295 = vmatpush.msra.mxu0 %v264
        %296 = vmatpush.msra.mxu0 %v263
        %297 = vmatpush.msra.mxu0 %v262
        %298 = vmatpush.msra.mxu0 %v261
        %299 = vmatpush.msra.mxu0 %v260
        %300 = vmatpush.msra.mxu0 %v259
        %301 = vmatmul.f32.gmra.mxu0 %v258
        %v302 = vpop.f32.mrf.mxu0
        %v303 = vadd.f32 %v283, %v302
        %304 = vdwg.mxu0
        %v305 = vtanh.pop %v303
        %v306 = vmul.f32 %v305, %v305
        %v307 = vsub.f32 1.0, %v306
        %v309 = vrot.slane %v307, 1
        %v310 = vrot.slane %v307, 2
        %v311 = vrot.slane %v307, 3
        %v312 = vrot.slane %v307, 4
        %v313 = vrot.slane %v307, 5
        %v314 = vrot.slane %v307, 6
        %v315 = vrot.slane %v307, 7
        %v316 = vperm.slane %v307, 0
        %v317 = vperm.slane %v309, 0
        %v318 = vperm.slane %v310, 0
        %v319 = vperm.slane %v311, 0
        %v320 = vperm.slane %v312, 0
        %v321 = vperm.slane %v313, 0
        %v322 = vperm.slane %v314, 0
        %v323 = vperm.slane %v315, 0
        %v332 = vmul.f32 %v316, %v280
        %v333 = vmul.f32 %v316, %v281
        %v334 = vmul.f32 %v317, %v280
        %v335 = vmul.f32 %v317, %v281
        %v336 = vmul.f32 %v318, %v280
        %v337 = vmul.f32 %v318, %v281
        %v338 = vmul.f32 %v319, %v280
        %v339 = vmul.f32 %v319, %v281
        %v340 = vmul.f32 %v320, %v280
        %v341 = vmul.f32 %v320, %v281
        %v342 = vmul.f32 %v321, %v280
        %v343 = vmul.f32 %v321, %v281
        %v344 = vmul.f32 %v322, %v280
        %v345 = vmul.f32 %v322, %v281
        %v346 = vmul.f32 %v323, %v280
        %v347 = vmul.f32 %v323, %v281
        %vm348 = vcmask 261120
        %v350 = vsel %vm348, %v332, 0
        %v353 = vsel %vm348, %v333, 0
        %v356 = vsel %vm348, %v334, 0
        %v359 = vsel %vm348, %v335, 0
        %v362 = vsel %vm348, %v336, 0
        %v365 = vsel %vm348, %v337, 0
        %v368 = vsel %vm348, %v338, 0
        %v371 = vsel %vm348, %v339, 0
        %v374 = vsel %vm348, %v340, 0
        %v377 = vsel %vm348, %v341, 0
        %v380 = vsel %vm348, %v342, 0
        %v383 = vsel %vm348, %v343, 0
        %v386 = vsel %vm348, %v344, 0
        %v389 = vsel %vm348, %v345, 0
        %v392 = vsel %vm348, %v346, 0
        %v395 = vsel %vm348, %v347, 0
        %397 = vmatpush.msra.mxu0 0.0
        %398 = vmatpush.msra.mxu0 0.0
        %399 = vmatpush.msra.mxu0 0.0
        %400 = vmatpush.msra.mxu0 0.0
        %401 = vmatpush.msra.mxu0 0.0
        %402 = vmatpush.msra.mxu0 0.0
        %403 = vmatpush.msra.mxu0 0.0
        %404 = vmatpush.msra.mxu0 0.0
        %405 = vmatpush.msra.mxu0 0.0
        %406 = vmatpush.msra.mxu0 0.0
        %407 = vmatpush.msra.mxu0 0.0
        %408 = vmatpush.msra.mxu0 0.0
        %409 = vmatpush.msra.mxu0 %v278
        %410 = vmatpush.msra.mxu0 %v277
        %411 = vmatpush.msra.mxu0 %v276
        %412 = vmatpush.msra.mxu0 %v275
        %413 = vmatmul.f32.gmra.mxu0 %v350
        %v414 = vpop.f32.mrf.mxu0
        %v415 = vadd.f32 0.0, %v414
        %416 = vmatmul.f32.gmra.mxu0 %v353
        %v417 = vpop.f32.mrf.mxu0
        %v418 = vadd.f32 0.0, %v417
        %419 = vmatmul.f32.gmra.mxu0 %v356
        %v420 = vpop.f32.mrf.mxu0
        %v421 = vadd.f32 0.0, %v420
        %422 = vmatmul.f32.gmra.mxu0 %v359
        %v423 = vpop.f32.mrf.mxu0
        %v424 = vadd.f32 0.0, %v423
        %425 = vmatmul.f32.gmra.mxu0 %v362
        %v426 = vpop.f32.mrf.mxu0
        %v427 = vadd.f32 0.0, %v426
        %428 = vmatmul.f32.gmra.mxu0 %v365
        %v429 = vpop.f32.mrf.mxu0
        %v430 = vadd.f32 0.0, %v429
        %431 = vmatmul.f32.gmra.mxu0 %v368
        %v432 = vpop.f32.mrf.mxu0
        %v433 = vadd.f32 0.0, %v432
        %434 = vmatmul.f32.gmra.mxu0 %v371
        %v435 = vpop.f32.mrf.mxu0
        %v436 = vadd.f32 0.0, %v435
        %437 = vmatmul.f32.gmra.mxu0 %v374
        %v438 = vpop.f32.mrf.mxu0
        %v439 = vadd.f32 0.0, %v438
        %440 = vmatmul.f32.gmra.mxu0 %v377
        %v441 = vpop.f32.mrf.mxu0
        %v442 = vadd.f32 0.0, %v441
        %443 = vmatmul.f32.gmra.mxu0 %v380
        %v444 = vpop.f32.mrf.mxu0
        %v445 = vadd.f32 0.0, %v444
        %446 = vmatmul.f32.gmra.mxu0 %v383
        %v447 = vpop.f32.mrf.mxu0
        %v448 = vadd.f32 0.0, %v447
        %449 = vmatmul.f32.gmra.mxu0 %v386
        %v450 = vpop.f32.mrf.mxu0
        %v451 = vadd.f32 0.0, %v450
        %452 = vmatmul.f32.gmra.mxu0 %v389
        %v453 = vpop.f32.mrf.mxu0
        %v454 = vadd.f32 0.0, %v453
        %455 = vmatmul.f32.gmra.mxu0 %v392
        %v456 = vpop.f32.mrf.mxu0
        %v457 = vadd.f32 0.0, %v456
        %458 = vmatmul.f32.gmra.mxu0 %v395
        %v459 = vpop.f32.mrf.mxu0
        %v460 = vadd.f32 0.0, %v459
        %461 = vdwg.mxu0
        %v463 = vrot.slane %v258, 1
        %v464 = vrot.slane %v258, 2
        %v465 = vrot.slane %v258, 3
        %v466 = vrot.slane %v258, 4
        %v467 = vrot.slane %v258, 5
        %v468 = vrot.slane %v258, 6
        %v469 = vrot.slane %v258, 7
        %v470 = vperm.slane %v258, 0
        %v471 = vperm.slane %v463, 0
        %v472 = vperm.slane %v464, 0
        %v473 = vperm.slane %v465, 0
        %v474 = vperm.slane %v466, 0
        %v475 = vperm.slane %v467, 0
        %v476 = vperm.slane %v468, 0
        %v477 = vperm.slane %v469, 0
        %v486 = vmul.f32 %v415, %v470
        %v487 = vmul.f32 %v418, %v470
        %v488 = vmul.f32 %v421, %v471
        %v489 = vmul.f32 %v424, %v471
        %v490 = vmul.f32 %v427, %v472
        %v491 = vmul.f32 %v430, %v472
        %v492 = vmul.f32 %v433, %v473
        %v493 = vmul.f32 %v436, %v473
        %v494 = vmul.f32 %v439, %v474
        %v495 = vmul.f32 %v442, %v474
        %v496 = vmul.f32 %v445, %v475
        %v497 = vmul.f32 %v448, %v475
        %v498 = vmul.f32 %v451, %v476
        %v499 = vmul.f32 %v454, %v476
        %v500 = vmul.f32 %v457, %v477
        %v501 = vmul.f32 %v460, %v477
        %502 = vst [vmem:[%s245] sm:$0xff] %v486
        %503 = vst [vmem:[%s245 + $0x8] sm:$0xff] %v487
        %504 = vst [vmem:[%s245 + $0x10] sm:$0xff] %v488
        %505 = vst [vmem:[%s245 + $0x18] sm:$0xff] %v489
        %506 = vst [vmem:[%s245 + $0x20] sm:$0xff] %v490
        %507 = vst [vmem:[%s245 + $0x28] sm:$0xff] %v491
        %508 = vst [vmem:[%s245 + $0x30] sm:$0xff] %v492
        %509 = vst [vmem:[%s245 + $0x38] sm:$0xff] %v493
        %510 = vst [vmem:[%s245 + $0x40] sm:$0xff] %v494
        %511 = vst [vmem:[%s245 + $0x48] sm:$0xff] %v495
        %512 = vst [vmem:[%s245 + $0x50] sm:$0xff] %v496
        %513 = vst [vmem:[%s245 + $0x58] sm:$0xff] %v497
        %514 = vst [vmem:[%s245 + $0x60] sm:$0xff] %v498
        %515 = vst [vmem:[%s245 + $0x68] sm:$0xff] %v499
        %516 = vst [vmem:[%s245 + $0x70] sm:$0xff] %v500
        %517 = vst [vmem:[%s245 + $0x78] sm:$0xff] %v501
        %s518 = sand.u32 %s156, 1
        %s519 = scalar_lea.sflag [#allocation3], %s518
        %s520 = sand.u32 %s156, 1
        %s521 = smul.addr %s520, 128
        %s522 = scalar_lea.vmem [#allocation2], %s521
        // Predicated region
        $region41: #{tpu_custom_call.1} parent=39 // pred_check
          %p523 = pneg %p166
        $region42: #{tpu_custom_call.1} parent=39 // pred_check_branch
          %525 = sbr.rel (%p523) target = $region44
        $region43: #{tpu_custom_call.1} parent=39 // pred_region
          %s526 = smul.u32 8, %s23
          %s527 = smul.u32 2, %s24
          %529 = vsyncadd %s519, 0
          %s530 = smul.addr %s526, 2
          %s531 = sadd.s32 %s527, %s530
          %s532 = smul.addr %s531, 8
          %s533 = scalar_lea.hbm %s5, %s532
          %s534 = sshll.u32 %s522, 4
          %s535 = int_to_ptr.vmem [resolvable:$true] %s534
          %s536 = sshll.u32 %s533, 4
          %s537 = int_to_ptr.hbm [resolvable:$true] %s536
          %542 = dma.vmem_to_hbm [thread:$0]  %s535, 2048, %s537, %s519, 128, 128, 8
        $region44: #{tpu_custom_call.1} parent=39 // pred_fallthru
          _
      $region40: #{tpu_custom_call.1} parent=5 // pred_fallthru
        _
      %p543 = scmp.le.s32.totalorder 2, %s14
      // Predicated region
      $region45: #{tpu_custom_call.1} parent=5 // pred_check
        %p544 = pneg %p543
      $region46: #{tpu_custom_call.1} parent=5 // pred_check_branch
        %546 = sbr.rel (%p544) target = $region48
      $region47: #{tpu_custom_call.1} parent=5 // pred_region
        %s547 = ssub.s32 %s14, 2
        // Predicated region
        $region49: #{tpu_custom_call.1} parent=47 // pred_check
          %p548 = pneg %p172
        $region50: #{tpu_custom_call.1} parent=47 // pred_check_branch
          %550 = sbr.rel (%p548) target = $region52
        $region51: #{tpu_custom_call.1} parent=47 // pred_region
          %s551 = sand.u32 %s157, 1
          %s552 = scalar_lea.sflag [#allocation3], %s551
          %s553 = sand.u32 %s157, 1
          %s554 = smul.addr %s553, 128
          %s555 = scalar_lea.vmem [#allocation2], %s554
          %557 = dma.done %s552, 2048
        $region52: #{tpu_custom_call.1} parent=47 // pred_fallthru
          _
      $region48: #{tpu_custom_call.1} parent=5 // pred_fallthru
        _
    $region6: #{tpu_custom_call.1} parent=1 // loop_footer
      %s18 = sadd.s32 1, %s14
    $region7: #{tpu_custom_call.1} parent=1 // loop_footer_branch
      %13 = sbr.rel target = $region3
    $region8: #{tpu_custom_call.1} parent=1 // loop_exit
      _
    %558 = vsyncpa [#allocation3], 1
    %s559 = scalar_lea.sflag [#allocation3], 1
    %560 = vsyncpa %s559, 1

</llo_original>
